<compile_context>
chip_gen: v6e
topology: v6e:2x2x1
jax: 0.10.0
libtpu: 0.0.40
codegen_flags: <defaults>
</compile_context>

<pallas_src>
import functools

import jax
import jax.numpy as jnp
from jax.experimental import pallas as pl
from jax.experimental.pallas import tpu as pltpu

BN_EPS = 1e-5


# ----------------------------------------------------------------------------
# Pallas kernel
# ----------------------------------------------------------------------------
def linear_bn_act_kernel(x_ref, w_ref, s_ref, b_ref, o_ref, acc_ref, *, apply_relu):
    """o = act((x @ w) * scale + shift), accumulated over the K grid axis.

    x_ref: (TM, TK) bf16   w_ref: (TK, TN) bf16
    s_ref/b_ref: (1, TN) f32   o_ref: (TM, TN) f32   acc_ref: (TM, TN) f32
    """
    @pl.when(pl.program_id(2) == 0)
    def _():
        acc_ref[...] = jnp.zeros_like(acc_ref)

    acc_ref[...] += jnp.dot(x_ref[...], w_ref[...],
                            preferred_element_type=jnp.float32)

    @pl.when(pl.program_id(2) == pl.num_programs(2) - 1)
    def _():
        y = acc_ref[...] * s_ref[...] + b_ref[...]
        if apply_relu:
            y = jnp.maximum(y, 0.0)
        o_ref[...] = y.astype(o_ref.dtype)


# ----------------------------------------------------------------------------
# Wrapper
# ----------------------------------------------------------------------------
def _round_up(x, m):
    return (x + m - 1) // m * m


def _pick_tile(dim, candidates):
    for c in candidates:
        if dim % c == 0:
            return c
    return dim


def _vmem_limit_bytes():
    # Stay within half of physical VMEM (v7x has only 64 MiB per TensorCore).
    try:
        cap = int(pltpu.get_tpu_info().vmem_capacity_bytes)
    except Exception:  # pragma: no cover - conservative fallback
        cap = 64 * 1024 * 1024
    return max(32 * 1024 * 1024, min(cap // 2, 64 * 1024 * 1024))


def fused_linear_bn_act(x2d, w_t, scale, shift, *, apply_relu=True,
                        matmul_dtype=jnp.bfloat16):
    """x2d: (M, K) f32, w_t: (K, N) f32, scale/shift: (N,) f32 -> (M, N) f32."""
    M, K = x2d.shape
    N = w_t.shape[1]

    Mp = _round_up(M, 8)
    Kp = _round_up(K, 128)
    Np = _round_up(N, 128)

    xp = jnp.pad(x2d.astype(matmul_dtype), ((0, Mp - M), (0, Kp - K)))
    wp = jnp.pad(w_t.astype(matmul_dtype), ((0, Kp - K), (0, Np - N)))
    sp = jnp.pad(scale.astype(jnp.float32), (0, Np - N)).reshape(1, Np)
    bp = jnp.pad(shift.astype(jnp.float32), (0, Np - N)).reshape(1, Np)

    # Bounded tile sizes (independent of problem size) so VMEM stays small and
    # double-buffering always fits, even at v7x's 64 MiB.
    TM = _pick_tile(Mp, (256, 128, 64, 32, 16, 8))
    TN = _pick_tile(Np, (512, 256, 128))
    TK = _pick_tile(Kp, (512, 256, 128))

    grid = (Mp // TM, Np // TN, Kp // TK)
    kern = functools.partial(linear_bn_act_kernel, apply_relu=apply_relu)

    out = pl.pallas_call(
        kern,
        out_shape=jax.ShapeDtypeStruct((Mp, Np), jnp.float32),
        grid=grid,
        in_specs=[
            pl.BlockSpec((TM, TK), lambda i, j, k: (i, k)),
            pl.BlockSpec((TK, TN), lambda i, j, k: (k, j)),
            pl.BlockSpec((1, TN), lambda i, j, k: (0, j)),
            pl.BlockSpec((1, TN), lambda i, j, k: (0, j)),
        ],
        out_specs=pl.BlockSpec((TM, TN), lambda i, j, k: (i, j)),
        scratch_shapes=[pltpu.VMEM((TM, TN), jnp.float32)],
        compiler_params=pltpu.CompilerParams(
            dimension_semantics=("parallel", "parallel", "arbitrary"),
            vmem_limit_bytes=_vmem_limit_bytes(),
        ),
    )(xp, wp, sp, bp)
    return out[:M, :N]


# ----------------------------------------------------------------------------
# LinearBlock: parameters + forward (mirrors the PyTorch module)
# ----------------------------------------------------------------------------
def init_linear_block(key, in_planes, out_planes, input_sz, *,
                      bias=True, batch_norm=True):
    k_feat = in_planes * input_sz * input_sz
    kw, kb, kg, kbeta, km, kv = jax.random.split(key, 6)
    bound = 1.0 / (k_feat ** 0.5)
    p = {
        "w": jax.random.uniform(kw, (out_planes, k_feat), jnp.float32,
                                -bound, bound),
        "b": (jax.random.uniform(kb, (out_planes,), jnp.float32, -bound, bound)
              if bias else jnp.zeros((out_planes,), jnp.float32)),
    }
    if batch_norm:
        p["gamma"] = 1.0 + 0.1 * jax.random.normal(kg, (out_planes,), jnp.float32)
        p["beta"] = 0.1 * jax.random.normal(kbeta, (out_planes,), jnp.float32)
        p["mean"] = 0.05 * jax.random.normal(km, (out_planes,), jnp.float32)
        p["var"] = 1.0 + 0.1 * jax.random.uniform(kv, (out_planes,), jnp.float32)
    return p


def linear_block_forward(x, params, *, batch_norm=True, relu=True):
    """x: (B, in_planes, input_sz, input_sz) -> (B, out_planes)."""
    B = x.shape[0]
    x2d = x.reshape(B, -1)
    w_t = params["w"].T                                   # (K, N)
    if batch_norm:
        inv_std = 1.0 / jnp.sqrt(params["var"] + BN_EPS)
        scale = params["gamma"] * inv_std
        shift = params["beta"] + (params["b"] - params["mean"]) * scale
    else:
        scale = jnp.ones_like(params["b"])
        shift = params["b"]
    return fused_linear_bn_act(x2d, w_t, scale, shift, apply_relu=relu)


def linear_block_reference(x, params, *, batch_norm=True, relu=True):
    """Pure-JAX f32 reference (inference-mode BN)."""
    B = x.shape[0]
    y = x.reshape(B, -1) @ params["w"].T + params["b"]
    if batch_norm:
        y = ((y - params["mean"]) / jnp.sqrt(params["var"] + BN_EPS)
             * params["gamma"] + params["beta"])
    if relu:
        y = jnp.maximum(y, 0.0)
    return y


# ----------------------------------------------------------------------------
# Main
# ----------------------------------------------------------------------------
if __name__ == "__main__":
    batch, in_planes, input_sz, out_planes = 16, 4, 16, 256   # K = 1024

    key = jax.random.PRNGKey(0)
    kp, kx = jax.random.split(key)
    params = init_linear_block(kp, in_planes, out_planes, input_sz)
    x = jax.random.normal(kx, (batch, in_planes, input_sz, input_sz), jnp.float32)

    out = linear_block_forward(x, params)
    out = jax.block_until_ready(out)

    ref = linear_block_reference(x, params)
    ref = jax.block_until_ready(ref)

    assert out.shape == (batch, out_planes), out.shape
    assert bool(jnp.all(jnp.isfinite(out)))
    # bf16 MXU operands with f32 accumulation -> loose-ish tolerance vs f32 ref.
    err = float(jnp.max(jnp.abs(out - ref)))
    tol = 2e-2 * max(1.0, float(jnp.max(jnp.abs(ref))))
    assert err <= tol, (err, tol)

    print("KERNEL_OK")
</pallas_src>

<mosaic_0001>
module attributes {stable_mosaic.version = 11 : i64} {
  func.func @linear_bn_act_kernel(%arg0: i32, %arg1: i32, %arg2: i32, %arg3: memref<16x512xbf16, #tpu.memory_space<vmem>>, %arg4: memref<512x256xbf16, #tpu.memory_space<vmem>>, %arg5: memref<1x256xf32, #tpu.memory_space<vmem>>, %arg6: memref<1x256xf32, #tpu.memory_space<vmem>>, %arg7: memref<16x256xf32, #tpu.memory_space<vmem>>, %arg8: memref<16x256xf32, #tpu.memory_space<vmem>>) attributes {dimension_semantics = [#tpu.dimension_semantics<parallel>, #tpu.dimension_semantics<parallel>, #tpu.dimension_semantics<arbitrary>], iteration_bounds = array<i64: 1, 1, 2>, scalar_prefetch = 0 : i64, scratch_operands = 1 : i64, tpu.core_type = #tpu.core_type<tc>, window_params = [{transform_indices = @transform_0, window_bounds = array<i64: 16, 512>}, {transform_indices = @transform_1, window_bounds = array<i64: 512, 256>}, {transform_indices = @transform_2, window_bounds = array<i64: 1, 256>}, {transform_indices = @transform_3, window_bounds = array<i64: 1, 256>}, {transform_indices = @transform_4, window_bounds = array<i64: 16, 256>}]} {
    %c0_i32 = arith.constant 0 : i32
    %0 = arith.cmpi eq, %arg2, %c0_i32 : i32
    %1 = arith.extui %0 : i1 to i32
    %c0_i32_0 = arith.constant 0 : i32
    %2 = arith.cmpi ne, %1, %c0_i32_0 : i32
    scf.if %2 {
      %cst_9 = arith.constant 0.000000e+00 : f32
      %12 = vector.broadcast %cst_9 : f32 to vector<16x256xf32>
      %c0_10 = arith.constant 0 : index
      %c0_11 = arith.constant 0 : index
      %13 = vector.load %arg8[%c0_10, %c0_11] : memref<16x256xf32, #tpu.memory_space<vmem>>, vector<16x256xf32>
      tpu.vector_store %arg8[%c0_10, %c0_11], %12 {strides = array<i32>} : memref<16x256xf32, #tpu.memory_space<vmem>>, vector<16x256xf32>,
    } else {
    }
    %c0 = arith.constant 0 : index
    %c0_1 = arith.constant 0 : index
    %3 = vector.load %arg8[%c0, %c0_1] : memref<16x256xf32, #tpu.memory_space<vmem>>, vector<16x256xf32>
    %c0_2 = arith.constant 0 : index
    %c0_3 = arith.constant 0 : index
    %4 = vector.load %arg3[%c0_2, %c0_3] : memref<16x512xbf16, #tpu.memory_space<vmem>>, vector<16x512xbf16>
    %c0_4 = arith.constant 0 : index
    %c0_5 = arith.constant 0 : index
    %5 = vector.load %arg4[%c0_4, %c0_5] : memref<512x256xbf16, #tpu.memory_space<vmem>>, vector<512x256xbf16>
    %cst = arith.constant dense<0.000000e+00> : vector<16x256xf32>
    %6 = tpu.matmul %4, %5, %cst {dimension_numbers = #tpu.dot_dimension_numbers<[1], [0], [0], [1], [0, 0, 1, 1], [], []>} : vector<16x512xbf16>, vector<512x256xbf16>, vector<16x256xf32> -> vector<16x256xf32>
    %7 = arith.addf %3, %6 : vector<16x256xf32>
    %c0_6 = arith.constant 0 : index
    %c0_7 = arith.constant 0 : index
    %8 = vector.load %arg8[%c0_6, %c0_7] : memref<16x256xf32, #tpu.memory_space<vmem>>, vector<16x256xf32>
    tpu.vector_store %arg8[%c0_6, %c0_7], %7 {strides = array<i32>} : memref<16x256xf32, #tpu.memory_space<vmem>>, vector<16x256xf32>,
    %c1_i32 = arith.constant 1 : i32
    %9 = arith.cmpi eq, %arg2, %c1_i32 : i32
    %10 = arith.extui %9 : i1 to i32
    %c0_i32_8 = arith.constant 0 : i32
    %11 = arith.cmpi ne, %10, %c0_i32_8 : i32
    scf.if %11 {
      %c0_9 = arith.constant 0 : index
      %c0_10 = arith.constant 0 : index
      %12 = vector.load %arg8[%c0_9, %c0_10] : memref<16x256xf32, #tpu.memory_space<vmem>>, vector<16x256xf32>
      %c0_11 = arith.constant 0 : index
      %c0_12 = arith.constant 0 : index
      %13 = vector.load %arg5[%c0_11, %c0_12] : memref<1x256xf32, #tpu.memory_space<vmem>>, vector<1x256xf32>
      %14 = vector.broadcast %13 : vector<1x256xf32> to vector<16x256xf32>
      %15 = arith.mulf %12, %14 : vector<16x256xf32>
      %c0_13 = arith.constant 0 : index
      %c0_14 = arith.constant 0 : index
      %16 = vector.load %arg6[%c0_13, %c0_14] : memref<1x256xf32, #tpu.memory_space<vmem>>, vector<1x256xf32>
      %17 = vector.broadcast %16 : vector<1x256xf32> to vector<16x256xf32>
      %18 = arith.addf %15, %17 : vector<16x256xf32>
      %cst_15 = arith.constant 0.000000e+00 : f32
      %19 = vector.broadcast %cst_15 : f32 to vector<16x256xf32>
      %20 = arith.maximumf %18, %19 : vector<16x256xf32>
      %c0_16 = arith.constant 0 : index
      %c0_17 = arith.constant 0 : index
      %21 = vector.load %arg7[%c0_16, %c0_17] : memref<16x256xf32, #tpu.memory_space<vmem>>, vector<16x256xf32>
      tpu.vector_store %arg7[%c0_16, %c0_17], %20 {strides = array<i32>} : memref<16x256xf32, #tpu.memory_space<vmem>>, vector<16x256xf32>,
    } else {
    }
    return
  }
  func.func @transform_0(%arg0: i32, %arg1: i32, %arg2: i32) -> (i32, i32) {
    %c0_i32 = arith.constant 0 : i32
    return %arg0, %arg2 : i32, i32
  }
  func.func @transform_1(%arg0: i32, %arg1: i32, %arg2: i32) -> (i32, i32) {
    %c0_i32 = arith.constant 0 : i32
    return %arg2, %arg1 : i32, i32
  }
  func.func @transform_2(%arg0: i32, %arg1: i32, %arg2: i32) -> (i32, i32) {
    %c0_i32 = arith.constant 0 : i32
    %c0_i32_0 = arith.constant 0 : i32
    return %c0_i32, %arg1 : i32, i32
  }
  func.func @transform_3(%arg0: i32, %arg1: i32, %arg2: i32) -> (i32, i32) {
    %c0_i32 = arith.constant 0 : i32
    %c0_i32_0 = arith.constant 0 : i32
    return %c0_i32, %arg1 : i32, i32
  }
  func.func @transform_4(%arg0: i32, %arg1: i32, %arg2: i32) -> (i32, i32) {
    %c0_i32 = arith.constant 0 : i32
    return %arg0, %arg1 : i32, i32
  }
}

</mosaic_0001>

<llo_original>
// kernel: tpu_custom_call.1
$region0: #{tpu_custom_call.1}
  #allocation0 [shape = 'u32[]', space=smem, size = 0x4, offset = 0x4, fixed_abs, tag = 'smem constant byte address 0x4 - core index']
  #allocation1 [shape = 'u32[144,128]{1,0:T(1,128)}', space=vmem, size = 0x12000, scoped, tag = 'internal scratch']
  #allocation2 [shape = 'f32[16,256]{1,0:T(8,128)}', space=vmem, size = 0x4000, scoped, tag = 'scratch operand']
  %s0 = inlined_call_operand.hbm [shape: bf16[16,1024], index: 0, kind: input, shape index: {}]
  %s1 = inlined_call_operand.hbm [shape: bf16[1024,256], index: 1, kind: input, shape index: {}]
  %s2 = inlined_call_operand.vmem [shape: f32[1,256], index: 2, kind: input, shape index: {}]
  %s3 = inlined_call_operand.vmem [shape: f32[1,256], index: 3, kind: input, shape index: {}]
  %s4 = inlined_call_operand.hbm [shape: f32[16,256], index: 4, kind: output, shape index: {}]
  %s5 = sld [smem:[#allocation0]]
  $region65: #{tpu_custom_call.1} parent=0
    _
  %s7 = ssub.s32 1, %s5
  %s8 = scalar_select 0, %s7, %s5
  $region1: #{tpu_custom_call.1} parent=0
    #allocation3 [shape = 'u8[32768]{0}', space=vmem, size = 0x8000, scoped, tag = 'input window, operand 0']
    #allocation4 [shape = 's32[2]{0}', space=sflag, size = 0x8, scoped, tag = 'scoped memory for tpu_custom_call.1']
    #allocation5 [shape = 's32[2]{0}', space=sflag, size = 0x8, scoped, tag = 'scoped memory for tpu_custom_call.1']
    #allocation6 [shape = 'u8[524288]{0}', space=vmem, size = 0x80000, scoped, tag = 'input window, operand 1']
    #allocation7 [shape = 's32[2]{0}', space=sflag, size = 0x8, scoped, tag = 'scoped memory for tpu_custom_call.1']
    #allocation8 [shape = 'u8[16384]{0}', space=vmem, size = 0x4000, scoped, tag = 'output window, operand 0, single buffered']
    %9 = vsyncpa [#allocation4], 0
    %s10 = scalar_lea.sflag [#allocation4], 1
    %11 = vsyncpa %s10, 0
    %12 = vsyncpa [#allocation7], 0
    %s13 = scalar_lea.sflag [#allocation7], 1
    %14 = vsyncpa %s13, 0
    %15 = vsyncpa [#allocation5], 0
    loop: start=0, step=1, limit=4
    $region2: #{tpu_custom_call.1} parent=1 // loop_pre_header
      _
    $region3: #{tpu_custom_call.1} parent=1 // loop_header
      %s17 = sphi 0, %s21
      %p18 = scmp.ge.s32.totalorder %s17, 4
      %s24 = sphi 0, %s43
      %s25 = sphi 0, %s39
      %s26 = sphi 0, %s35
      %s27 = sphi 0, %s24
      %s28 = sphi 0, %s25
      %s29 = sphi 0, %s26
      %s30 = sphi 0, %s27
      %s31 = sphi 0, %s28
      %s32 = sphi 0, %s29
      %s48 = sphi 0, %s50
      %s51 = sphi 0, %s48
      %s52 = sphi 0, %s51
      %s68 = sphi 0, %s52
      %s76 = sphi 0, %s78
      %s79 = sphi 0, %s76
      %s80 = sphi 0, %s79
      %s96 = sphi 0, %s80
      %s102 = sphi 0, %s104
      %s105 = sphi 0, %s102
      %s106 = sphi 0, %s105
      %s122 = sphi 0, %s106
      %s128 = sphi 0, %s130
      %s131 = sphi 0, %s128
      %s132 = sphi 0, %s131
      %s148 = sphi 0, %s132
      %s156 = sphi 0, %s158
      %s159 = sphi 0, %s156
      %s160 = sphi 0, %s159
      %s176 = sphi 0, %s160
    $region4: #{tpu_custom_call.1} parent=1 // loop_header_branch
      %20 = sbr.rel (%p18) target = $region8
    $region5: #{tpu_custom_call.1} parent=1 // loop_body
      %s22 = ssub.s32 %s17, 1
      %s23 = ssub.s32 %s17, 2
      %s33 = sadd.s32 1, %s26
      %p34 = scmp.ge.s32.totalorder %s33, 2
      %s35 = scalar_select %p34, 0, %s33
      %s36 = sadd.s32 1, %s25
      %s37 = scalar_select %p34, %s36, %s25
      %p38 = scmp.ge.s32.totalorder %s37, 1
      %s39 = scalar_select %p38, 0, %s37
      %s40 = sadd.s32 1, %s24
      %s41 = scalar_select %p38, %s40, %s24
      %p42 = scmp.ge.s32.totalorder %s41, 1
      %s43 = scalar_select %p42, 0, %s41
      %s44 = ssub.s32 %s24, %s43
      %s45 = ssub.s32 %s26, %s35
      %s46 = sor.u32 %s44, %s45
      %p47 = scmp.eq.s32.totalorder %s46, 0
      %s49 = sadd.s32 %s48, 1
      %s50 = scalar_select %p47, %s48, %s49
      %p53 = pneg %p47
      %p54 = scmp.eq.s32.totalorder %s17, 1
      %p55 = por %p53, %p54
      %p56 = scmp.ne.s32.totalorder %s48, %s51
      %p57 = scmp.eq.s32.totalorder %s17, 0
      %p58 = por %p56, %p57
      %p59 = scmp.ne.s32.totalorder %s48, %s51
      %p60 = scmp.eq.s32.totalorder %s22, 1
      %p61 = por %p59, %p60
      %p62 = scmp.ne.s32.totalorder %s51, %s52
      %p63 = scmp.eq.s32.totalorder %s22, 0
      %p64 = por %p62, %p63
      %p65 = scmp.ne.s32.totalorder %s51, %s52
      %p66 = scmp.eq.s32.totalorder %s23, 1
      %p67 = por %p65, %p66
      %p69 = scmp.ne.s32.totalorder %s52, %s68
      %p70 = scmp.eq.s32.totalorder %s23, 0
      %p71 = por %p69, %p70
      %s72 = ssub.s32 %s26, %s35
      %s73 = ssub.s32 %s25, %s39
      %s74 = sor.u32 %s72, %s73
      %p75 = scmp.eq.s32.totalorder %s74, 0
      %s77 = sadd.s32 %s76, 1
      %s78 = scalar_select %p75, %s76, %s77
      %p81 = pneg %p75
      %p82 = scmp.eq.s32.totalorder %s17, 1
      %p83 = por %p81, %p82
      %p84 = scmp.ne.s32.totalorder %s76, %s79
      %p85 = scmp.eq.s32.totalorder %s17, 0
      %p86 = por %p84, %p85
      %p87 = scmp.ne.s32.totalorder %s76, %s79
      %p88 = scmp.eq.s32.totalorder %s22, 1
      %p89 = por %p87, %p88
      %p90 = scmp.ne.s32.totalorder %s79, %s80
      %p91 = scmp.eq.s32.totalorder %s22, 0
      %p92 = por %p90, %p91
      %p93 = scmp.ne.s32.totalorder %s79, %s80
      %p94 = scmp.eq.s32.totalorder %s23, 1
      %p95 = por %p93, %p94
      %p97 = scmp.ne.s32.totalorder %s80, %s96
      %p98 = scmp.eq.s32.totalorder %s23, 0
      %p99 = por %p97, %p98
      %s100 = ssub.s32 %s25, %s39
      %p101 = scmp.eq.s32.totalorder %s100, 0
      %s103 = sadd.s32 %s102, 1
      %s104 = scalar_select %p101, %s102, %s103
      %p107 = pneg %p101
      %p108 = scmp.eq.s32.totalorder %s17, 1
      %p109 = por %p107, %p108
      %p110 = scmp.ne.s32.totalorder %s102, %s105
      %p111 = scmp.eq.s32.totalorder %s17, 0
      %p112 = por %p110, %p111
      %p113 = scmp.ne.s32.totalorder %s102, %s105
      %p114 = scmp.eq.s32.totalorder %s22, 1
      %p115 = por %p113, %p114
      %p116 = scmp.ne.s32.totalorder %s105, %s106
      %p117 = scmp.eq.s32.totalorder %s22, 0
      %p118 = por %p116, %p117
      %p119 = scmp.ne.s32.totalorder %s105, %s106
      %p120 = scmp.eq.s32.totalorder %s23, 1
      %p121 = por %p119, %p120
      %p123 = scmp.ne.s32.totalorder %s106, %s122
      %p124 = scmp.eq.s32.totalorder %s23, 0
      %p125 = por %p123, %p124
      %s126 = ssub.s32 %s25, %s39
      %p127 = scmp.eq.s32.totalorder %s126, 0
      %s129 = sadd.s32 %s128, 1
      %s130 = scalar_select %p127, %s128, %s129
      %p133 = pneg %p127
      %p134 = scmp.eq.s32.totalorder %s17, 1
      %p135 = por %p133, %p134
      %p136 = scmp.ne.s32.totalorder %s128, %s131
      %p137 = scmp.eq.s32.totalorder %s17, 0
      %p138 = por %p136, %p137
      %p139 = scmp.ne.s32.totalorder %s128, %s131
      %p140 = scmp.eq.s32.totalorder %s22, 1
      %p141 = por %p139, %p140
      %p142 = scmp.ne.s32.totalorder %s131, %s132
      %p143 = scmp.eq.s32.totalorder %s22, 0
      %p144 = por %p142, %p143
      %p145 = scmp.ne.s32.totalorder %s131, %s132
      %p146 = scmp.eq.s32.totalorder %s23, 1
      %p147 = por %p145, %p146
      %p149 = scmp.ne.s32.totalorder %s132, %s148
      %p150 = scmp.eq.s32.totalorder %s23, 0
      %p151 = por %p149, %p150
      %s152 = ssub.s32 %s24, %s43
      %s153 = ssub.s32 %s25, %s39
      %s154 = sor.u32 %s152, %s153
      %p155 = scmp.eq.s32.totalorder %s154, 0
      %s157 = sadd.s32 %s156, 1
      %s158 = scalar_select %p155, %s156, %s157
      %p161 = pneg %p155
      %p162 = scmp.eq.s32.totalorder %s17, 1
      %p163 = por %p161, %p162
      %p164 = scmp.ne.s32.totalorder %s156, %s159
      %p165 = scmp.eq.s32.totalorder %s17, 0
      %p166 = por %p164, %p165
      %p167 = scmp.ne.s32.totalorder %s156, %s159
      %p168 = scmp.eq.s32.totalorder %s22, 1
      %p169 = por %p167, %p168
      %p170 = scmp.ne.s32.totalorder %s159, %s160
      %p171 = scmp.eq.s32.totalorder %s22, 0
      %p172 = por %p170, %p171
      %p173 = scmp.ne.s32.totalorder %s159, %s160
      %p174 = scmp.eq.s32.totalorder %s23, 1
      %p175 = por %p173, %p174
      %p177 = scmp.ne.s32.totalorder %s160, %s176
      %p178 = scmp.eq.s32.totalorder %s23, 0
      %p179 = por %p177, %p178
      %p180 = scmp.le.s32.totalorder 1, %s17
      %p181 = scmp.lt.s32.totalorder %s17, 3
      %p182 = pnand %p180, %p181
      %p183 = pneg %p182
      // Predicated region
      $region9: #{tpu_custom_call.1} parent=5 // pred_check
        _
      $region10: #{tpu_custom_call.1} parent=5 // pred_check_branch
        %185 = sbr.rel (%p182) target = $region12
      $region11: #{tpu_custom_call.1} parent=5 // pred_region
        %s186 = ssub.s32 %s17, 1
        // Predicated region
        $region13: #{tpu_custom_call.1} parent=11 // pred_check
          %p187 = pneg %p118
        $region14: #{tpu_custom_call.1} parent=11 // pred_check_branch
          %189 = sbr.rel (%p187) target = $region16
        $region15: #{tpu_custom_call.1} parent=11 // pred_region
          %s190 = smul.u32 2, %s28
          %p191 = scmp.lt.s32.totalorder %s190, 1
          %s192 = scalar_select %p191, %s190, 1
          %s193 = scalar_lea.vmem %s2, %s192
          %s194 = smul.u32 2, %s28
        $region16: #{tpu_custom_call.1} parent=11 // pred_fallthru
          _
        // Predicated region
        $region17: #{tpu_custom_call.1} parent=11 // pred_check
          %p195 = pneg %p144
        $region18: #{tpu_custom_call.1} parent=11 // pred_check_branch
          %197 = sbr.rel (%p195) target = $region20
        $region19: #{tpu_custom_call.1} parent=11 // pred_region
          %s198 = smul.u32 2, %s28
          %p199 = scmp.lt.s32.totalorder %s198, 1
          %s200 = scalar_select %p199, %s198, 1
          %s201 = scalar_lea.vmem %s3, %s200
          %s202 = smul.u32 2, %s28
        $region20: #{tpu_custom_call.1} parent=11 // pred_fallthru
          _
      $region12: #{tpu_custom_call.1} parent=5 // pred_fallthru
        _
      %p203 = scmp.lt.s32.totalorder %s17, 2
      // Predicated region
      $region21: #{tpu_custom_call.1} parent=5 // pred_check
        %p204 = pneg %p203
      $region22: #{tpu_custom_call.1} parent=5 // pred_check_branch
        %206 = sbr.rel (%p204) target = $region24
      $region23: #{tpu_custom_call.1} parent=5 // pred_region
        // Predicated region
        $region25: #{tpu_custom_call.1} parent=23 // pred_check
          %p207 = pneg %p58
        $region26: #{tpu_custom_call.1} parent=23 // pred_check_branch
          %209 = sbr.rel (%p207) target = $region28
        $region27: #{tpu_custom_call.1} parent=23 // pred_region
          %s210 = sand.u32 %s48, 1
          %s211 = scalar_lea.sflag [#allocation4], %s210
          %s212 = sand.u32 %s48, 1
          %s213 = smul.addr %s212, 32
          %s214 = scalar_lea.vmem [#allocation3], %s213
          %s215 = smul.u32 2, %s24
          %s216 = smul.u32 4, %s26
          %s218 = ssub.s32 512, 512
          %219 = vsyncadd %s211, %s218
          %s220 = smul.addr %s215, 8
          %s221 = sadd.s32 %s216, %s220
          %s222 = smul.addr %s221, 64
          %s223 = scalar_lea.hbm %s0, %s222
          %s224 = sshll.u32 %s214, 4
          %s225 = int_to_ptr.vmem [resolvable:$true] %s224
          %230 = dma.hbm_to_vmem [thread:$0]  %s223, 512, %s225, %s211, 512, 256, 16
        $region28: #{tpu_custom_call.1} parent=23 // pred_fallthru
          _
        // Predicated region
        $region29: #{tpu_custom_call.1} parent=23 // pred_check
          %p231 = pneg %p86
        $region30: #{tpu_custom_call.1} parent=23 // pred_check_branch
          %233 = sbr.rel (%p231) target = $region32
        $region31: #{tpu_custom_call.1} parent=23 // pred_region
          %s234 = sand.u32 %s76, 1
          %s235 = scalar_lea.sflag [#allocation7], %s234
          %s236 = sand.u32 %s76, 1
          %s237 = smul.addr %s236, 512
          %s238 = scalar_lea.vmem [#allocation6], %s237
          %s239 = smul.u32 64, %s26
          %s240 = smul.u32 2, %s25
          %s242 = ssub.s32 8192, 8192
          %243 = vsyncadd %s235, %s242
          %s244 = smul.addr %s239, 2
          %s245 = sadd.s32 %s240, %s244
          %s246 = smul.addr %s245, 64
          %s247 = scalar_lea.hbm %s1, %s246
          %s248 = sshll.u32 %s238, 4
          %s249 = int_to_ptr.vmem [resolvable:$true] %s248
          %254 = dma.hbm_to_vmem [thread:$0]  %s247, 8192, %s249, %s235, 128, 128, 8
        $region32: #{tpu_custom_call.1} parent=23 // pred_fallthru
          _
      $region24: #{tpu_custom_call.1} parent=5 // pred_fallthru
        _
      %p255 = scmp.le.s32.totalorder 1, %s17
      %p256 = scmp.lt.s32.totalorder %s17, 3
      %p257 = pnand %p255, %p256
      %p258 = pneg %p257
      // Predicated region
      $region33: #{tpu_custom_call.1} parent=5 // pred_check
        _
      $region34: #{tpu_custom_call.1} parent=5 // pred_check_branch
        %260 = sbr.rel (%p257) target = $region36
      $region35: #{tpu_custom_call.1} parent=5 // pred_region
        %s261 = ssub.s32 %s17, 1
        %s262 = sand.u32 %s51, 1
        %s263 = scalar_lea.sflag [#allocation4], %s262
        %s264 = sand.u32 %s51, 1
        %s265 = smul.addr %s264, 32
        %s266 = scalar_lea.vmem [#allocation3], %s265
        // Predicated region
        $region37: #{tpu_custom_call.1} parent=35 // pred_check
          %p267 = pneg %p64
        $region38: #{tpu_custom_call.1} parent=35 // pred_check_branch
          %269 = sbr.rel (%p267) target = $region40
        $region39: #{tpu_custom_call.1} parent=35 // pred_region
          %270 = dma.done %s263, 512
        $region40: #{tpu_custom_call.1} parent=35 // pred_fallthru
          _
        %s271 = sand.u32 %s79, 1
        %s272 = scalar_lea.sflag [#allocation7], %s271
        %s273 = sand.u32 %s79, 1
        %s274 = smul.addr %s273, 512
        %s275 = scalar_lea.vmem [#allocation6], %s274
        // Predicated region
        $region41: #{tpu_custom_call.1} parent=35 // pred_check
          %p276 = pneg %p92
        $region42: #{tpu_custom_call.1} parent=35 // pred_check_branch
          %278 = sbr.rel (%p276) target = $region44
        $region43: #{tpu_custom_call.1} parent=35 // pred_region
          %279 = dma.done %s272, 8192
        $region44: #{tpu_custom_call.1} parent=35 // pred_fallthru
          _
        %s280 = sand.u32 %s51, 1
        %s281 = scalar_lea.sflag [#allocation4], %s280
        %s282 = sand.u32 %s51, 1
        %s283 = smul.addr %s282, 32
        %s284 = scalar_lea.vmem [#allocation3], %s283
        %p285 = pneg %p64
        %p286 = pneg %p61
        %s287 = sand.u32 %s79, 1
        %s288 = scalar_lea.sflag [#allocation7], %s287
        %s289 = sand.u32 %s79, 1
        %s290 = smul.addr %s289, 512
        %s291 = scalar_lea.vmem [#allocation6], %s290
        %p292 = pneg %p92
        %p293 = pneg %p89
        %s294 = smul.u32 2, %s28
        %p295 = scmp.lt.s32.totalorder %s294, 1
        %s296 = scalar_select %p295, %s294, 1
        %s297 = scalar_lea.vmem %s2, %s296
        %p298 = pneg %p118
        %p299 = pneg %p115
        %s300 = smul.u32 2, %s28
        %p301 = scmp.lt.s32.totalorder %s300, 1
        %s302 = scalar_select %p301, %s300, 1
        %s303 = scalar_lea.vmem %s3, %s302
        %p304 = pneg %p144
        %p305 = pneg %p141
        %p306 = pneg %p172
        %p307 = pneg %p169
        %s308 = smul.u32 2, %s27
        %s309 = smul.u32 4, %s29
        %s310 = smul.u32 64, %s29
        %s311 = smul.u32 2, %s28
        %s312 = smul.u32 2, %s28
        %p313 = scmp.lt.s32.totalorder %s312, 1
        %s314 = scalar_select %p313, %s312, 1
        %s315 = scalar_lea.vmem %s2, %s314
        %s316 = smul.u32 2, %s28
        %s317 = smul.u32 2, %s28
        %p318 = scmp.lt.s32.totalorder %s317, 1
        %s319 = scalar_select %p318, %s317, 1
        %s320 = scalar_lea.vmem %s3, %s319
        %s321 = smul.u32 2, %s28
        %s322 = smul.u32 2, %s27
        %s323 = smul.u32 2, %s28
        %p324 = scmp.eq.s32.totalorder %s29, 0
        // Predicated region
        $region45: #{tpu_custom_call.1} parent=35 // pred_check
          %p325 = pneg %p324
        $region46: #{tpu_custom_call.1} parent=35 // pred_check_branch
          %327 = sbr.rel (%p325) target = $region48
        $region47: #{tpu_custom_call.1} parent=35 // pred_region
          %328 = vst [vmem:[#allocation2] sm:$0xff] 0.0
          %329 = vst [vmem:[#allocation2 + $0x8] sm:$0xff] 0.0
          %330 = vst [vmem:[#allocation2 + $0x10] sm:$0xff] 0.0
          %331 = vst [vmem:[#allocation2 + $0x18] sm:$0xff] 0.0
        $region48: #{tpu_custom_call.1} parent=35 // pred_fallthru
          _
        %v332 = vld [vmem:[#allocation2] sm:$0xff]
        %v333 = vld [vmem:[#allocation2 + $0x8] sm:$0xff]
        %v334 = vld [vmem:[#allocation2 + $0x10] sm:$0xff]
        %v335 = vld [vmem:[#allocation2 + $0x18] sm:$0xff]
        %v336 = vld [vmem:[%s266] sm:$0xff]
        %v337 = vld [vmem:[%s266 + $0x8] sm:$0xff]
        %v338 = vld [vmem:[%s266 + $0x10] sm:$0xff]
        %v339 = vld [vmem:[%s266 + $0x18] sm:$0xff]
        %v340 = vld [vmem:[%s275] sm:$0xff]
        %v341 = vld [vmem:[%s275 + $0x8] sm:$0xff]
        %v342 = vld [vmem:[%s275 + $0x10] sm:$0xff]
        %v343 = vld [vmem:[%s275 + $0x18] sm:$0xff]
        %v344 = vld [vmem:[%s275 + $0x20] sm:$0xff]
        %v345 = vld [vmem:[%s275 + $0x28] sm:$0xff]
        %v346 = vld [vmem:[%s275 + $0x30] sm:$0xff]
        %v347 = vld [vmem:[%s275 + $0x38] sm:$0xff]
        %v348 = vld [vmem:[%s275 + $0x40] sm:$0xff]
        %v349 = vld [vmem:[%s275 + $0x48] sm:$0xff]
        %v350 = vld [vmem:[%s275 + $0x50] sm:$0xff]
        %v351 = vld [vmem:[%s275 + $0x58] sm:$0xff]
        %v352 = vld [vmem:[%s275 + $0x60] sm:$0xff]
        %v353 = vld [vmem:[%s275 + $0x68] sm:$0xff]
        %v354 = vld [vmem:[%s275 + $0x70] sm:$0xff]
        %v355 = vld [vmem:[%s275 + $0x78] sm:$0xff]
        %v356 = vld [vmem:[%s275 + $0x80] sm:$0xff]
        %v357 = vld [vmem:[%s275 + $0x88] sm:$0xff]
        %v358 = vld [vmem:[%s275 + $0x90] sm:$0xff]
        %v359 = vld [vmem:[%s275 + $0x98] sm:$0xff]
        %v360 = vld [vmem:[%s275 + $0xa0] sm:$0xff]
        %v361 = vld [vmem:[%s275 + $0xa8] sm:$0xff]
        %v362 = vld [vmem:[%s275 + $0xb0] sm:$0xff]
        %v363 = vld [vmem:[%s275 + $0xb8] sm:$0xff]
        %v364 = vld [vmem:[%s275 + $0xc0] sm:$0xff]
        %v365 = vld [vmem:[%s275 + $0xc8] sm:$0xff]
        %v366 = vld [vmem:[%s275 + $0xd0] sm:$0xff]
        %v367 = vld [vmem:[%s275 + $0xd8] sm:$0xff]
        %v368 = vld [vmem:[%s275 + $0xe0] sm:$0xff]
        %v369 = vld [vmem:[%s275 + $0xe8] sm:$0xff]
        %v370 = vld [vmem:[%s275 + $0xf0] sm:$0xff]
        %v371 = vld [vmem:[%s275 + $0xf8] sm:$0xff]
        %v372 = vld [vmem:[%s275 + $0x100] sm:$0xff]
        %v373 = vld [vmem:[%s275 + $0x108] sm:$0xff]
        %v374 = vld [vmem:[%s275 + $0x110] sm:$0xff]
        %v375 = vld [vmem:[%s275 + $0x118] sm:$0xff]
        %v376 = vld [vmem:[%s275 + $0x120] sm:$0xff]
        %v377 = vld [vmem:[%s275 + $0x128] sm:$0xff]
        %v378 = vld [vmem:[%s275 + $0x130] sm:$0xff]
        %v379 = vld [vmem:[%s275 + $0x138] sm:$0xff]
        %v380 = vld [vmem:[%s275 + $0x140] sm:$0xff]
        %v381 = vld [vmem:[%s275 + $0x148] sm:$0xff]
        %v382 = vld [vmem:[%s275 + $0x150] sm:$0xff]
        %v383 = vld [vmem:[%s275 + $0x158] sm:$0xff]
        %v384 = vld [vmem:[%s275 + $0x160] sm:$0xff]
        %v385 = vld [vmem:[%s275 + $0x168] sm:$0xff]
        %v386 = vld [vmem:[%s275 + $0x170] sm:$0xff]
        %v387 = vld [vmem:[%s275 + $0x178] sm:$0xff]
        %v388 = vld [vmem:[%s275 + $0x180] sm:$0xff]
        %v389 = vld [vmem:[%s275 + $0x188] sm:$0xff]
        %v390 = vld [vmem:[%s275 + $0x190] sm:$0xff]
        %v391 = vld [vmem:[%s275 + $0x198] sm:$0xff]
        %v392 = vld [vmem:[%s275 + $0x1a0] sm:$0xff]
        %v393 = vld [vmem:[%s275 + $0x1a8] sm:$0xff]
        %v394 = vld [vmem:[%s275 + $0x1b0] sm:$0xff]
        %v395 = vld [vmem:[%s275 + $0x1b8] sm:$0xff]
        %v396 = vld [vmem:[%s275 + $0x1c0] sm:$0xff]
        %v397 = vld [vmem:[%s275 + $0x1c8] sm:$0xff]
        %v398 = vld [vmem:[%s275 + $0x1d0] sm:$0xff]
        %v399 = vld [vmem:[%s275 + $0x1d8] sm:$0xff]
        %v400 = vld [vmem:[%s275 + $0x1e0] sm:$0xff]
        %v401 = vld [vmem:[%s275 + $0x1e8] sm:$0xff]
        %v402 = vld [vmem:[%s275 + $0x1f0] sm:$0xff]
        %v403 = vld [vmem:[%s275 + $0x1f8] sm:$0xff]
        %v408 = vunpack.c.l.b16 %v336
        %v409 = vunpack.c.h.b16 %v336
        %v410 = vunpack.c.l.b16 %v337
        %v411 = vunpack.c.h.b16 %v337
        %v412 = vunpack.c.l.b16 %v338
        %v413 = vunpack.c.h.b16 %v338
        %v414 = vunpack.c.l.b16 %v339
        %v415 = vunpack.c.h.b16 %v339
        %v416 = vpack.c.b16 %v412, %v408
        %v417 = vpack.c.b16 %v413, %v409
        %v418 = vpack.c.b16 %v414, %v410
        %v419 = vpack.c.b16 %v415, %v411
        %v488 = vunpack.c.l.b16 %v340
        %v489 = vunpack.c.h.b16 %v340
        %v490 = vunpack.c.l.b16 %v341
        %v491 = vunpack.c.h.b16 %v341
        %v492 = vunpack.c.l.b16 %v342
        %v493 = vunpack.c.h.b16 %v342
        %v494 = vunpack.c.l.b16 %v343
        %v495 = vunpack.c.h.b16 %v343
        %v496 = vunpack.c.l.b16 %v344
        %v497 = vunpack.c.h.b16 %v344
        %v498 = vunpack.c.l.b16 %v345
        %v499 = vunpack.c.h.b16 %v345
        %v500 = vunpack.c.l.b16 %v346
        %v501 = vunpack.c.h.b16 %v346
        %v502 = vunpack.c.l.b16 %v347
        %v503 = vunpack.c.h.b16 %v347
        %v504 = vunpack.c.l.b16 %v348
        %v505 = vunpack.c.h.b16 %v348
        %v506 = vunpack.c.l.b16 %v349
        %v507 = vunpack.c.h.b16 %v349
        %v508 = vunpack.c.l.b16 %v350
        %v509 = vunpack.c.h.b16 %v350
        %v510 = vunpack.c.l.b16 %v351
        %v511 = vunpack.c.h.b16 %v351
        %v512 = vunpack.c.l.b16 %v352
        %v513 = vunpack.c.h.b16 %v352
        %v514 = vunpack.c.l.b16 %v353
        %v515 = vunpack.c.h.b16 %v353
        %v516 = vunpack.c.l.b16 %v354
        %v517 = vunpack.c.h.b16 %v354
        %v518 = vunpack.c.l.b16 %v355
        %v519 = vunpack.c.h.b16 %v355
        %v520 = vunpack.c.l.b16 %v356
        %v521 = vunpack.c.h.b16 %v356
        %v522 = vunpack.c.l.b16 %v357
        %v523 = vunpack.c.h.b16 %v357
        %v524 = vunpack.c.l.b16 %v358
        %v525 = vunpack.c.h.b16 %v358
        %v526 = vunpack.c.l.b16 %v359
        %v527 = vunpack.c.h.b16 %v359
        %v528 = vunpack.c.l.b16 %v360
        %v529 = vunpack.c.h.b16 %v360
        %v530 = vunpack.c.l.b16 %v361
        %v531 = vunpack.c.h.b16 %v361
        %v532 = vunpack.c.l.b16 %v362
        %v533 = vunpack.c.h.b16 %v362
        %v534 = vunpack.c.l.b16 %v363
        %v535 = vunpack.c.h.b16 %v363
        %v536 = vunpack.c.l.b16 %v364
        %v537 = vunpack.c.h.b16 %v364
        %v538 = vunpack.c.l.b16 %v365
        %v539 = vunpack.c.h.b16 %v365
        %v540 = vunpack.c.l.b16 %v366
        %v541 = vunpack.c.h.b16 %v366
        %v542 = vunpack.c.l.b16 %v367
        %v543 = vunpack.c.h.b16 %v367
        %v544 = vunpack.c.l.b16 %v368
        %v545 = vunpack.c.h.b16 %v368
        %v546 = vunpack.c.l.b16 %v369
        %v547 = vunpack.c.h.b16 %v369
        %v548 = vunpack.c.l.b16 %v370
        %v549 = vunpack.c.h.b16 %v370
        %v550 = vunpack.c.l.b16 %v371
        %v551 = vunpack.c.h.b16 %v371
        %v552 = vunpack.c.l.b16 %v372
        %v553 = vunpack.c.h.b16 %v372
        %v554 = vunpack.c.l.b16 %v373
        %v555 = vunpack.c.h.b16 %v373
        %v556 = vunpack.c.l.b16 %v374
        %v557 = vunpack.c.h.b16 %v374
        %v558 = vunpack.c.l.b16 %v375
        %v559 = vunpack.c.h.b16 %v375
        %v560 = vunpack.c.l.b16 %v376
        %v561 = vunpack.c.h.b16 %v376
        %v562 = vunpack.c.l.b16 %v377
        %v563 = vunpack.c.h.b16 %v377
        %v564 = vunpack.c.l.b16 %v378
        %v565 = vunpack.c.h.b16 %v378
        %v566 = vunpack.c.l.b16 %v379
        %v567 = vunpack.c.h.b16 %v379
        %v568 = vunpack.c.l.b16 %v380
        %v569 = vunpack.c.h.b16 %v380
        %v570 = vunpack.c.l.b16 %v381
        %v571 = vunpack.c.h.b16 %v381
        %v572 = vunpack.c.l.b16 %v382
        %v573 = vunpack.c.h.b16 %v382
        %v574 = vunpack.c.l.b16 %v383
        %v575 = vunpack.c.h.b16 %v383
        %v576 = vunpack.c.l.b16 %v384
        %v577 = vunpack.c.h.b16 %v384
        %v578 = vunpack.c.l.b16 %v385
        %v579 = vunpack.c.h.b16 %v385
        %v580 = vunpack.c.l.b16 %v386
        %v581 = vunpack.c.h.b16 %v386
        %v582 = vunpack.c.l.b16 %v387
        %v583 = vunpack.c.h.b16 %v387
        %v584 = vunpack.c.l.b16 %v388
        %v585 = vunpack.c.h.b16 %v388
        %v586 = vunpack.c.l.b16 %v389
        %v587 = vunpack.c.h.b16 %v389
        %v588 = vunpack.c.l.b16 %v390
        %v589 = vunpack.c.h.b16 %v390
        %v590 = vunpack.c.l.b16 %v391
        %v591 = vunpack.c.h.b16 %v391
        %v592 = vunpack.c.l.b16 %v392
        %v593 = vunpack.c.h.b16 %v392
        %v594 = vunpack.c.l.b16 %v393
        %v595 = vunpack.c.h.b16 %v393
        %v596 = vunpack.c.l.b16 %v394
        %v597 = vunpack.c.h.b16 %v394
        %v598 = vunpack.c.l.b16 %v395
        %v599 = vunpack.c.h.b16 %v395
        %v600 = vunpack.c.l.b16 %v396
        %v601 = vunpack.c.h.b16 %v396
        %v602 = vunpack.c.l.b16 %v397
        %v603 = vunpack.c.h.b16 %v397
        %v604 = vunpack.c.l.b16 %v398
        %v605 = vunpack.c.h.b16 %v398
        %v606 = vunpack.c.l.b16 %v399
        %v607 = vunpack.c.h.b16 %v399
        %v608 = vunpack.c.l.b16 %v400
        %v609 = vunpack.c.h.b16 %v400
        %v610 = vunpack.c.l.b16 %v401
        %v611 = vunpack.c.h.b16 %v401
        %v612 = vunpack.c.l.b16 %v402
        %v613 = vunpack.c.h.b16 %v402
        %v614 = vunpack.c.l.b16 %v403
        %v615 = vunpack.c.h.b16 %v403
        %v616 = vpack.c.b16 %v490, %v488
        %v617 = vpack.c.b16 %v491, %v489
        %v618 = vpack.c.b16 %v494, %v492
        %v619 = vpack.c.b16 %v495, %v493
        %v620 = vpack.c.b16 %v498, %v496
        %v621 = vpack.c.b16 %v499, %v497
        %v622 = vpack.c.b16 %v502, %v500
        %v623 = vpack.c.b16 %v503, %v501
        %v624 = vpack.c.b16 %v506, %v504
        %v625 = vpack.c.b16 %v507, %v505
        %v626 = vpack.c.b16 %v510, %v508
        %v627 = vpack.c.b16 %v511, %v509
        %v628 = vpack.c.b16 %v514, %v512
        %v629 = vpack.c.b16 %v515, %v513
        %v630 = vpack.c.b16 %v518, %v516
        %v631 = vpack.c.b16 %v519, %v517
        %v632 = vpack.c.b16 %v522, %v520
        %v633 = vpack.c.b16 %v523, %v521
        %v634 = vpack.c.b16 %v526, %v524
        %v635 = vpack.c.b16 %v527, %v525
        %v636 = vpack.c.b16 %v530, %v528
        %v637 = vpack.c.b16 %v531, %v529
        %v638 = vpack.c.b16 %v534, %v532
        %v639 = vpack.c.b16 %v535, %v533
        %v640 = vpack.c.b16 %v538, %v536
        %v641 = vpack.c.b16 %v539, %v537
        %v642 = vpack.c.b16 %v542, %v540
        %v643 = vpack.c.b16 %v543, %v541
        %v644 = vpack.c.b16 %v546, %v544
        %v645 = vpack.c.b16 %v547, %v545
        %v646 = vpack.c.b16 %v550, %v548
        %v647 = vpack.c.b16 %v551, %v549
        %v648 = vpack.c.b16 %v554, %v552
        %v649 = vpack.c.b16 %v555, %v553
        %v650 = vpack.c.b16 %v558, %v556
        %v651 = vpack.c.b16 %v559, %v557
        %v652 = vpack.c.b16 %v562, %v560
        %v653 = vpack.c.b16 %v563, %v561
        %v654 = vpack.c.b16 %v566, %v564
        %v655 = vpack.c.b16 %v567, %v565
        %v656 = vpack.c.b16 %v570, %v568
        %v657 = vpack.c.b16 %v571, %v569
        %v658 = vpack.c.b16 %v574, %v572
        %v659 = vpack.c.b16 %v575, %v573
        %v660 = vpack.c.b16 %v578, %v576
        %v661 = vpack.c.b16 %v579, %v577
        %v662 = vpack.c.b16 %v582, %v580
        %v663 = vpack.c.b16 %v583, %v581
        %v664 = vpack.c.b16 %v586, %v584
        %v665 = vpack.c.b16 %v587, %v585
        %v666 = vpack.c.b16 %v590, %v588
        %v667 = vpack.c.b16 %v591, %v589
        %v668 = vpack.c.b16 %v594, %v592
        %v669 = vpack.c.b16 %v595, %v593
        %v670 = vpack.c.b16 %v598, %v596
        %v671 = vpack.c.b16 %v599, %v597
        %v672 = vpack.c.b16 %v602, %v600
        %v673 = vpack.c.b16 %v603, %v601
        %v674 = vpack.c.b16 %v606, %v604
        %v675 = vpack.c.b16 %v607, %v605
        %v676 = vpack.c.b16 %v610, %v608
        %v677 = vpack.c.b16 %v611, %v609
        %v678 = vpack.c.b16 %v614, %v612
        %v679 = vpack.c.b16 %v615, %v613
        %744 = vmatprep.subr.bf16.mxu0 %v631
        %745 = vmatpush1.bf16.msra.mxu0 %v630
        %746 = vmatprep.subr.bf16.mxu0 %v629
        %747 = vmatpush1.bf16.msra.mxu0 %v628
        %748 = vmatprep.subr.bf16.mxu0 %v627
        %749 = vmatpush1.bf16.msra.mxu0 %v626
        %750 = vmatprep.subr.bf16.mxu0 %v625
        %751 = vmatpush1.bf16.msra.mxu0 %v624
        %752 = vmatprep.subr.bf16.mxu0 %v623
        %753 = vmatpush1.bf16.msra.mxu0 %v622
        %754 = vmatprep.subr.bf16.mxu0 %v621
        %755 = vmatpush1.bf16.msra.mxu0 %v620
        %756 = vmatprep.subr.bf16.mxu0 %v619
        %757 = vmatpush1.bf16.msra.mxu0 %v618
        %758 = vmatprep.subr.bf16.mxu0 %v617
        %759 = vmatpush1.bf16.msra.mxu0 %v616
        %760 = vmatprep.subr.bf16.mxu0 %v647
        %761 = vmatpush2.bf16.msra.mxu0 %v646
        %762 = vmatprep.subr.bf16.mxu0 %v645
        %763 = vmatpush2.bf16.msra.mxu0 %v644
        %764 = vmatprep.subr.bf16.mxu0 %v643
        %765 = vmatpush2.bf16.msra.mxu0 %v642
        %766 = vmatprep.subr.bf16.mxu0 %v641
        %767 = vmatpush2.bf16.msra.mxu0 %v640
        %768 = vmatprep.subr.bf16.mxu0 %v639
        %769 = vmatpush2.bf16.msra.mxu0 %v638
        %770 = vmatprep.subr.bf16.mxu0 %v637
        %771 = vmatpush2.bf16.msra.mxu0 %v636
        %772 = vmatprep.subr.bf16.mxu0 %v635
        %773 = vmatpush2.bf16.msra.mxu0 %v634
        %774 = vmatprep.subr.bf16.mxu0 %v633
        %775 = vmatpush2.bf16.msra.mxu0 %v632
        %776 = vmatprep.mubr.bf16.mxu0 %v417
        %777 = vmatmul.mubr.bf16.gmra.mxu0 %v416
        %v778 = vpop.f32.mrf.mxu0
        %v779 = vadd.f32 0.0, %v778
        %v780 = vpop.f32.mrf.mxu0
        %v781 = vadd.f32 0.0, %v780
        %v782 = vpop.f32.mrf.mxu0
        %v783 = vadd.f32 0.0, %v782
        %v784 = vpop.f32.mrf.mxu0
        %v785 = vadd.f32 0.0, %v784
        %786 = vdwg.mxu0
        %787 = vmatprep.subr.bf16.mxu0 %v663
        %788 = vmatpush1.bf16.msra.mxu0 %v662
        %789 = vmatprep.subr.bf16.mxu0 %v661
        %790 = vmatpush1.bf16.msra.mxu0 %v660
        %791 = vmatprep.subr.bf16.mxu0 %v659
        %792 = vmatpush1.bf16.msra.mxu0 %v658
        %793 = vmatprep.subr.bf16.mxu0 %v657
        %794 = vmatpush1.bf16.msra.mxu0 %v656
        %795 = vmatprep.subr.bf16.mxu0 %v655
        %796 = vmatpush1.bf16.msra.mxu0 %v654
        %797 = vmatprep.subr.bf16.mxu0 %v653
        %798 = vmatpush1.bf16.msra.mxu0 %v652
        %799 = vmatprep.subr.bf16.mxu0 %v651
        %800 = vmatpush1.bf16.msra.mxu0 %v650
        %801 = vmatprep.subr.bf16.mxu0 %v649
        %802 = vmatpush1.bf16.msra.mxu0 %v648
        %803 = vmatprep.subr.bf16.mxu0 %v679
        %804 = vmatpush2.bf16.msra.mxu0 %v678
        %805 = vmatprep.subr.bf16.mxu0 %v677
        %806 = vmatpush2.bf16.msra.mxu0 %v676
        %807 = vmatprep.subr.bf16.mxu0 %v675
        %808 = vmatpush2.bf16.msra.mxu0 %v674
        %809 = vmatprep.subr.bf16.mxu0 %v673
        %810 = vmatpush2.bf16.msra.mxu0 %v672
        %811 = vmatprep.subr.bf16.mxu0 %v671
        %812 = vmatpush2.bf16.msra.mxu0 %v670
        %813 = vmatprep.subr.bf16.mxu0 %v669
        %814 = vmatpush2.bf16.msra.mxu0 %v668
        %815 = vmatprep.subr.bf16.mxu0 %v667
        %816 = vmatpush2.bf16.msra.mxu0 %v666
        %817 = vmatprep.subr.bf16.mxu0 %v665
        %818 = vmatpush2.bf16.msra.mxu0 %v664
        %819 = vmatprep.mubr.bf16.mxu0 %v419
        %820 = vmatmul.mubr.bf16.gmra.mxu0 %v418
        %v821 = vpop.f32.mrf.mxu0
        %v822 = vadd.f32 %v779, %v821
        %v823 = vpop.f32.mrf.mxu0
        %v824 = vadd.f32 %v781, %v823
        %v825 = vpop.f32.mrf.mxu0
        %v826 = vadd.f32 %v783, %v825
        %v827 = vpop.f32.mrf.mxu0
        %v828 = vadd.f32 %v785, %v827
        %829 = vdwg.mxu0
        %v830 = vadd.f32 %v332, %v822
        %v831 = vadd.f32 %v333, %v824
        %v832 = vadd.f32 %v334, %v826
        %v833 = vadd.f32 %v335, %v828
        %834 = vst [vmem:[#allocation2] sm:$0xff] %v830
        %835 = vst [vmem:[#allocation2 + $0x8] sm:$0xff] %v831
        %836 = vst [vmem:[#allocation2 + $0x10] sm:$0xff] %v832
        %837 = vst [vmem:[#allocation2 + $0x18] sm:$0xff] %v833
        %p838 = scmp.eq.s32.totalorder %s29, 1
        // Predicated region
        $region49: #{tpu_custom_call.1} parent=35 // pred_check
          %p839 = pneg %p838
        $region50: #{tpu_custom_call.1} parent=35 // pred_check_branch
          %841 = sbr.rel (%p839) target = $region52
        $region51: #{tpu_custom_call.1} parent=35 // pred_region
          %v842 = vld [vmem:[#allocation2] sm:$0xff]
          %v843 = vld [vmem:[#allocation2 + $0x8] sm:$0xff]
          %v844 = vld [vmem:[#allocation2 + $0x10] sm:$0xff]
          %v845 = vld [vmem:[#allocation2 + $0x18] sm:$0xff]
          %v846 = vld [vmem:[%s315] sm:$0x3]
          %v848 = vlaneseq
          %v849 = vshrl.u32 %v848, 7
          %v850 = vsub.s32 0, %v849
          %v851 = vrot.slane %v846, %v850
          %v852 = vlaneseq
          %v853 = vshrl.u32 %v852, 7
          %v854 = vsub.s32 1, %v853
          %v855 = vrot.slane %v846, %v854
          %v858 = vmul.f32 %v842, %v851
          %v859 = vmul.f32 %v843, %v855
          %v860 = vmul.f32 %v844, %v851
          %v861 = vmul.f32 %v845, %v855
          %v862 = vld [vmem:[%s320] sm:$0x3]
          %v864 = vlaneseq
          %v865 = vshrl.u32 %v864, 7
          %v866 = vsub.s32 0, %v865
          %v867 = vrot.slane %v862, %v866
          %v868 = vlaneseq
          %v869 = vshrl.u32 %v868, 7
          %v870 = vsub.s32 1, %v869
          %v871 = vrot.slane %v862, %v870
          %v874 = vadd.f32 %v858, %v867
          %v875 = vadd.f32 %v859, %v871
          %v876 = vadd.f32 %v860, %v867
          %v877 = vadd.f32 %v861, %v871
          %v878 = vmax.f32 %v874, 0.0
          %v879 = vmax.f32 %v875, 0.0
          %v880 = vmax.f32 %v876, 0.0
          %v881 = vmax.f32 %v877, 0.0
          %882 = vst [vmem:[#allocation8] sm:$0xff] %v878
          %883 = vst [vmem:[#allocation8 + $0x8] sm:$0xff] %v879
          %884 = vst [vmem:[#allocation8 + $0x10] sm:$0xff] %v880
          %885 = vst [vmem:[#allocation8 + $0x18] sm:$0xff] %v881
        $region52: #{tpu_custom_call.1} parent=35 // pred_fallthru
          _
        // Predicated region
        $region53: #{tpu_custom_call.1} parent=35 // pred_check
          %p886 = pneg %p169
        $region54: #{tpu_custom_call.1} parent=35 // pred_check_branch
          %888 = sbr.rel (%p886) target = $region56
        $region55: #{tpu_custom_call.1} parent=35 // pred_region
          %s889 = smul.u32 2, %s27
          %s890 = smul.u32 2, %s28
          %s892 = ssub.s32 512, 512
          %893 = vsyncadd [#allocation5], %s892
          %s894 = smul.addr %s889, 2
          %s895 = sadd.s32 %s890, %s894
          %s896 = smul.addr %s895, 128
          %s897 = scalar_lea.hbm %s4, %s896
          %s898 = sshll.u32 [#allocation8], 4
          %s899 = int_to_ptr.vmem [resolvable:$true] %s898
          %904 = dma.vmem_to_hbm [thread:$0]  %s899, 512, %s897, [#allocation5], 256, 256, 16
        $region56: #{tpu_custom_call.1} parent=35 // pred_fallthru
          _
        // Predicated region
        $region57: #{tpu_custom_call.1} parent=35 // pred_check
          %p905 = pneg %p169
        $region58: #{tpu_custom_call.1} parent=35 // pred_check_branch
          %907 = sbr.rel (%p905) target = $region60
        $region59: #{tpu_custom_call.1} parent=35 // pred_region
          %908 = dma.done [#allocation5], 512
        $region60: #{tpu_custom_call.1} parent=35 // pred_fallthru
          _
      $region36: #{tpu_custom_call.1} parent=5 // pred_fallthru
        _
      %p909 = scmp.le.s32.totalorder 2, %s17
      // Predicated region
      $region61: #{tpu_custom_call.1} parent=5 // pred_check
        %p910 = pneg %p909
      $region62: #{tpu_custom_call.1} parent=5 // pred_check_branch
        %912 = sbr.rel (%p910) target = $region64
      $region63: #{tpu_custom_call.1} parent=5 // pred_region
        %s913 = ssub.s32 %s17, 2
      $region64: #{tpu_custom_call.1} parent=5 // pred_fallthru
        _
    $region6: #{tpu_custom_call.1} parent=1 // loop_footer
      %s21 = sadd.s32 1, %s17
    $region7: #{tpu_custom_call.1} parent=1 // loop_footer_branch
      %16 = sbr.rel target = $region3
    $region8: #{tpu_custom_call.1} parent=1 // loop_exit
      _
    %914 = vsyncpa [#allocation4], 1
    %s915 = scalar_lea.sflag [#allocation4], 1
    %916 = vsyncpa %s915, 1
    %917 = vsyncpa [#allocation7], 1
    %s918 = scalar_lea.sflag [#allocation7], 1
    %919 = vsyncpa %s918, 1
    %920 = vsyncpa [#allocation5], 1
    %s921 = scalar_lea.sflag [#allocation5], 1
    %922 = vsyncpa %s921, 1

</llo_original>
